<compile_context>
chip_gen: v6e
topology: v6e:2x2x1
jax: 0.10.0
libtpu: 0.0.40
codegen_flags: <defaults>
</compile_context>

<pallas_src>
import functools

import jax
import jax.numpy as jnp
from jax.experimental import pallas as pl
from jax.experimental.pallas import tpu as pltpu


def _bond_pool_kernel(hu_ref, hv_ref, w1_ref, b1_ref, w2_ref, b2_ref, o_ref,
                      *, mlp_hidden):
    """One bond tile: layers([h_u,h_v]) + layers([h_v,h_u]) in fused form."""
    # Lane-dense first layer: N = 2*mlp_hidden (128 for M=64), f32 accumulate.
    pu = jnp.dot(hu_ref[...], w1_ref[...], preferred_element_type=jnp.float32)
    pv = jnp.dot(hv_ref[...], w1_ref[...], preferred_element_type=jnp.float32)

    # Swap the two mlp_hidden halves of pv (XLU lane rotation, ~free slot):
    # [hv@w1a | hv@w1b] -> [hv@w1b | hv@w1a].
    pv_sw = pltpu.roll(pv, shift=mlp_hidden, axis=1)

    # q = [relu(fwd_pre) | relu(rev_pre)]  with fwd_pre = hu@w1a + hv@w1b + b1, etc.
    q = jnp.maximum(pu + pv_sw + b1_ref[...], 0.0)

    # (fwd + rev) @ w2 + 2*b2  via the stacked W2 = [w2; w2].
    out = jnp.dot(q.astype(w2_ref.dtype), w2_ref[...],
                  preferred_element_type=jnp.float32) + 2.0 * b2_ref[...]
    o_ref[...] = out.astype(o_ref.dtype)


def bond_pooling_forward(h_nodes, bond_src, bond_dst, params, *,
                         tile_bonds=2048, compute_dtype=None, min_tile=512):
    """Edge gather (JAX glue) + tiled Pallas fused-MLP-sum kernel (hot path).

    compute_dtype: None -> keep input dtype (f32 exact); jnp.bfloat16 -> cast
    activations/weights to bf16 (f32 accumulation kept) for v6e/v7x.
    """
    w1, b1, w2, b2 = params
    hidden = h_nodes.shape[1]
    mlp_hidden = w1.shape[1]
    out_dim = w2.shape[1]
    out_dtype = h_nodes.dtype

    # PyTorch nn.Linear biases are 1-D; normalize to (1, M) rows (f32 kept).
    b1 = jnp.asarray(b1, jnp.float32).reshape(1, -1)
    b2 = jnp.asarray(b2, jnp.float32).reshape(1, -1)

    # One-time fused weight prep (see header): Wcat, b1cat, W2stack.
    w1a = w1[:hidden, :]
    w1b = w1[hidden:, :]
    w_cat = jnp.concatenate([w1a, w1b], axis=1)        # (H, 2M)
    b1_cat = jnp.concatenate([b1, b1], axis=1)         # (1, 2M)
    w2_stack = jnp.concatenate([w2, w2], axis=0)       # (2M, O)

    if compute_dtype is not None:
        # bf16-in / f32-accumulate: halves activation + weight HBM bytes.
        h_nodes = h_nodes.astype(compute_dtype)
        w_cat = w_cat.astype(compute_dtype)
        w2_stack = w2_stack.astype(compute_dtype)

    # graph.apply_edges(_apply_edges): per-edge src/dst node features.
    # TODO(synk): in-kernel gather (VMEM-resident h_nodes + prefetched indices).
    h_u = jnp.take(h_nodes, bond_src, axis=0)          # (n_bonds, H)
    h_v = jnp.take(h_nodes, bond_dst, axis=0)          # (n_bonds, H)
    n_bonds = h_u.shape[0]

    # Bond-row tile: big tiles amortize ~0.35us per grid step; cap so large
    # graphs still get >=4 grid steps for the 2 TensorCores on v7x.  Sublane
    # alignment is 8 (f32) / 16 (bf16) unless the block is the full extent.
    tb = min(int(tile_bonds), n_bonds)
    if n_bonds >= 4 * min_tile:
        tb = min(tb, pl.cdiv(n_bonds, 4))
    if tb < n_bonds:
        align = 16 if compute_dtype == jnp.bfloat16 else 8
        tb = ((tb + align - 1) // align) * align
        tb = min(tb, n_bonds)
    grid = (pl.cdiv(n_bonds, tb),)

    def const_spec(arr):
        # Full-array block, same block every grid step -> stays VMEM-resident.
        nd = arr.ndim
        return pl.BlockSpec(arr.shape, lambda i, _nd=nd: (0,) * _nd)

    kernel = functools.partial(_bond_pool_kernel, mlp_hidden=mlp_hidden)

    return pl.pallas_call(
        kernel,
        out_shape=jax.ShapeDtypeStruct((n_bonds, out_dim), out_dtype),
        grid=grid,
        in_specs=[
            pl.BlockSpec((tb, hidden), lambda i: (i, 0)),   # h_u rows
            pl.BlockSpec((tb, hidden), lambda i: (i, 0)),   # h_v rows
            const_spec(w_cat),
            const_spec(b1_cat),
            const_spec(w2_stack),
            const_spec(b2),
        ],
        out_specs=pl.BlockSpec((tb, out_dim), lambda i: (i, 0)),
        compiler_params=pltpu.CompilerParams(
            dimension_semantics=("parallel",)),
    )(h_u, h_v, w_cat, b1_cat, w2_stack, b2)


def reference_forward(h_nodes, bond_src, bond_dst, params):
    """Pure-JAX f32 reference mirroring the PyTorch module."""
    w1, b1, w2, b2 = params

    def layers(x):
        h = jnp.maximum(x @ w1 + b1, 0.0)
        return h @ w2 + b2

    h_u = h_nodes[bond_src]
    h_v = h_nodes[bond_dst]
    h_forward = jnp.concatenate([h_u, h_v], axis=1)
    h_reverse = jnp.concatenate([h_v, h_u], axis=1)
    return layers(h_forward) + layers(h_reverse)


if __name__ == "__main__":
    key = jax.random.PRNGKey(0)

    n_nodes, hidden = 16, 32      # node features from the GCN stack
    n_bonds = 48                  # bonds (forward edges); reverse edges implied
    mlp_hidden, out_dim = 64, 8   # self.layers: Linear(64,64)->ReLU->Linear(64,8)

    k_h, k_src, k_dst, k_w1, k_b1, k_w2, k_b2 = jax.random.split(key, 7)

    h_nodes = jax.random.normal(k_h, (n_nodes, hidden), dtype=jnp.float32)
    bond_src = jax.random.randint(k_src, (n_bonds,), 0, n_nodes)
    bond_dst = jax.random.randint(k_dst, (n_bonds,), 0, n_nodes)

    # Deterministic synthetic parameters; biases 1-D like torch.nn.Linear.
    w1 = jax.random.normal(k_w1, (2 * hidden, mlp_hidden), dtype=jnp.float32) * 0.1
    b1 = jax.random.normal(k_b1, (mlp_hidden,), dtype=jnp.float32) * 0.1
    w2 = jax.random.normal(k_w2, (mlp_hidden, out_dim), dtype=jnp.float32) * 0.1
    b2 = jax.random.normal(k_b2, (out_dim,), dtype=jnp.float32) * 0.1
    params = (w1, b1, w2, b2)

    ref = reference_forward(h_nodes, bond_src, bond_dst, params)

    # f32 path, small tile to exercise the multi-step pipelined grid (3 steps).
    out = bond_pooling_forward(h_nodes, bond_src, bond_dst, params, tile_bonds=16)
    out = jax.block_until_ready(out)
    assert out.shape == (n_bonds, out_dim)
    assert jnp.allclose(out, ref, atol=1e-4, rtol=1e-4), "f32 mismatch vs reference"

    # bf16-in / f32-accumulate path (v6e/v7x feedback) — loosened tolerances.
    out_bf16 = bond_pooling_forward(h_nodes, bond_src, bond_dst, params,
                                    tile_bonds=16, compute_dtype=jnp.bfloat16)
    out_bf16 = jax.block_until_ready(out_bf16)
    assert out_bf16.shape == (n_bonds, out_dim)
    assert jnp.allclose(out_bf16, ref, atol=1e-1, rtol=1e-1), "bf16 mismatch vs reference"

    print("KERNEL_OK")
</pallas_src>

<mosaic_0001>
module attributes {stable_mosaic.version = 11 : i64} {
  func.func @_bond_pool_kernel(%arg0: i32, %arg1: memref<16x32xf32, #tpu.memory_space<vmem>>, %arg2: memref<16x32xf32, #tpu.memory_space<vmem>>, %arg3: memref<32x128xf32, #tpu.memory_space<vmem>>, %arg4: memref<1x128xf32, #tpu.memory_space<vmem>>, %arg5: memref<128x8xf32, #tpu.memory_space<vmem>>, %arg6: memref<1x8xf32, #tpu.memory_space<vmem>>, %arg7: memref<16x8xf32, #tpu.memory_space<vmem>>) attributes {dimension_semantics = [#tpu.dimension_semantics<parallel>], iteration_bounds = array<i64: 3>, scalar_prefetch = 0 : i64, scratch_operands = 0 : i64, tpu.core_type = #tpu.core_type<tc>, window_params = [{transform_indices = @transform_0, window_bounds = array<i64: 16, 32>}, {transform_indices = @transform_1, window_bounds = array<i64: 16, 32>}, {pipeline_mode = #tpu.pipeline_mode<synchronous>, transform_indices = @transform_2, window_bounds = array<i64: 32, 128>}, {pipeline_mode = #tpu.pipeline_mode<synchronous>, transform_indices = @transform_3, window_bounds = array<i64: 1, 128>}, {pipeline_mode = #tpu.pipeline_mode<synchronous>, transform_indices = @transform_4, window_bounds = array<i64: 128, 8>}, {pipeline_mode = #tpu.pipeline_mode<synchronous>, transform_indices = @transform_5, window_bounds = array<i64: 1, 8>}, {transform_indices = @transform_6, window_bounds = array<i64: 16, 8>}]} {
    %c0 = arith.constant 0 : index
    %c0_0 = arith.constant 0 : index
    %0 = vector.load %arg1[%c0, %c0_0] : memref<16x32xf32, #tpu.memory_space<vmem>>, vector<16x32xf32>
    %c0_1 = arith.constant 0 : index
    %c0_2 = arith.constant 0 : index
    %1 = vector.load %arg3[%c0_1, %c0_2] : memref<32x128xf32, #tpu.memory_space<vmem>>, vector<32x128xf32>
    %cst = arith.constant dense<0.000000e+00> : vector<16x128xf32>
    %2 = tpu.matmul %0, %1, %cst {dimension_numbers = #tpu.dot_dimension_numbers<[1], [0], [0], [1], [0, 0, 1, 1], [], []>} : vector<16x32xf32>, vector<32x128xf32>, vector<16x128xf32> -> vector<16x128xf32>
    %c0_3 = arith.constant 0 : index
    %c0_4 = arith.constant 0 : index
    %3 = vector.load %arg2[%c0_3, %c0_4] : memref<16x32xf32, #tpu.memory_space<vmem>>, vector<16x32xf32>
    %c0_5 = arith.constant 0 : index
    %c0_6 = arith.constant 0 : index
    %4 = vector.load %arg3[%c0_5, %c0_6] : memref<32x128xf32, #tpu.memory_space<vmem>>, vector<32x128xf32>
    %cst_7 = arith.constant dense<0.000000e+00> : vector<16x128xf32>
    %5 = tpu.matmul %3, %4, %cst_7 {dimension_numbers = #tpu.dot_dimension_numbers<[1], [0], [0], [1], [0, 0, 1, 1], [], []>} : vector<16x32xf32>, vector<32x128xf32>, vector<16x128xf32> -> vector<16x128xf32>
    %c64_i32 = arith.constant 64 : i32
    %6 = tpu.dynamic_rotate %5 by %c64_i32 dim 1 : vector<16x128xf32>, i32 -> vector<16x128xf32>
    %7 = arith.addf %2, %6 : vector<16x128xf32>
    %c0_8 = arith.constant 0 : index
    %c0_9 = arith.constant 0 : index
    %8 = vector.load %arg4[%c0_8, %c0_9] : memref<1x128xf32, #tpu.memory_space<vmem>>, vector<1x128xf32>
    %9 = vector.broadcast %8 : vector<1x128xf32> to vector<16x128xf32>
    %10 = arith.addf %7, %9 : vector<16x128xf32>
    %cst_10 = arith.constant 0.000000e+00 : f32
    %11 = vector.broadcast %cst_10 : f32 to vector<16x128xf32>
    %12 = arith.maximumf %10, %11 : vector<16x128xf32>
    %c0_11 = arith.constant 0 : index
    %c0_12 = arith.constant 0 : index
    %13 = vector.load %arg5[%c0_11, %c0_12] : memref<128x8xf32, #tpu.memory_space<vmem>>, vector<128x8xf32>
    %cst_13 = arith.constant dense<0.000000e+00> : vector<16x8xf32>
    %14 = tpu.matmul %12, %13, %cst_13 {dimension_numbers = #tpu.dot_dimension_numbers<[1], [0], [0], [1], [0, 0, 1, 1], [], []>} : vector<16x128xf32>, vector<128x8xf32>, vector<16x8xf32> -> vector<16x8xf32>
    %c0_14 = arith.constant 0 : index
    %c0_15 = arith.constant 0 : index
    %15 = vector.load %arg6[%c0_14, %c0_15] : memref<1x8xf32, #tpu.memory_space<vmem>>, vector<1x8xf32>
    %cst_16 = arith.constant 2.000000e+00 : f32
    %16 = vector.broadcast %cst_16 : f32 to vector<1x8xf32>
    %17 = arith.mulf %16, %15 : vector<1x8xf32>
    %18 = vector.broadcast %17 : vector<1x8xf32> to vector<16x8xf32>
    %19 = arith.addf %14, %18 : vector<16x8xf32>
    %c0_17 = arith.constant 0 : index
    %c0_18 = arith.constant 0 : index
    %20 = vector.load %arg7[%c0_17, %c0_18] : memref<16x8xf32, #tpu.memory_space<vmem>>, vector<16x8xf32>
    tpu.vector_store %arg7[%c0_17, %c0_18], %19 {strides = array<i32>} : memref<16x8xf32, #tpu.memory_space<vmem>>, vector<16x8xf32>,
    return
  }
  func.func @transform_0(%arg0: i32) -> (i32, i32) {
    %c0_i32 = arith.constant 0 : i32
    %c0_i32_0 = arith.constant 0 : i32
    return %arg0, %c0_i32 : i32, i32
  }
  func.func @transform_1(%arg0: i32) -> (i32, i32) {
    %c0_i32 = arith.constant 0 : i32
    %c0_i32_0 = arith.constant 0 : i32
    return %arg0, %c0_i32 : i32, i32
  }
  func.func @transform_2(%arg0: i32) -> (i32, i32) {
    %c0_i32 = arith.constant 0 : i32
    %c0_i32_0 = arith.constant 0 : i32
    %c0_i32_1 = arith.constant 0 : i32
    return %c0_i32, %c0_i32_0 : i32, i32
  }
  func.func @transform_3(%arg0: i32) -> (i32, i32) {
    %c0_i32 = arith.constant 0 : i32
    %c0_i32_0 = arith.constant 0 : i32
    %c0_i32_1 = arith.constant 0 : i32
    return %c0_i32, %c0_i32_0 : i32, i32
  }
  func.func @transform_4(%arg0: i32) -> (i32, i32) {
    %c0_i32 = arith.constant 0 : i32
    %c0_i32_0 = arith.constant 0 : i32
    %c0_i32_1 = arith.constant 0 : i32
    return %c0_i32, %c0_i32_0 : i32, i32
  }
  func.func @transform_5(%arg0: i32) -> (i32, i32) {
    %c0_i32 = arith.constant 0 : i32
    %c0_i32_0 = arith.constant 0 : i32
    %c0_i32_1 = arith.constant 0 : i32
    return %c0_i32, %c0_i32_0 : i32, i32
  }
  func.func @transform_6(%arg0: i32) -> (i32, i32) {
    %c0_i32 = arith.constant 0 : i32
    %c0_i32_0 = arith.constant 0 : i32
    return %arg0, %c0_i32 : i32, i32
  }
}

</mosaic_0001>

<llo_original>
// kernel: tpu_custom_call.1
$region0: #{tpu_custom_call.1}
  #allocation0 [shape = 'u32[]', space=smem, size = 0x4, offset = 0x4, fixed_abs, tag = 'smem constant byte address 0x4 - core index']
  #allocation1 [shape = 'u32[144,128]{1,0:T(1,128)}', space=vmem, size = 0x12000, scoped, tag = 'internal scratch']
  %s0 = inlined_call_operand.vmem [shape: f32[48,32], index: 0, kind: input, shape index: {}]
  %s1 = inlined_call_operand.vmem [shape: f32[48,32], index: 1, kind: input, shape index: {}]
  %s2 = inlined_call_operand.vmem [shape: f32[32,128], index: 2, kind: input, shape index: {}]
  %s3 = inlined_call_operand.vmem [shape: f32[1,128], index: 3, kind: input, shape index: {}]
  %s4 = inlined_call_operand.vmem [shape: f32[128,8], index: 4, kind: input, shape index: {}]
  %s5 = inlined_call_operand.vmem [shape: f32[1,8], index: 5, kind: input, shape index: {}]
  %s6 = inlined_call_operand.vmem [shape: f32[48,8], index: 6, kind: output, shape index: {}]
  %s7 = sld [smem:[#allocation0]]
  $region57: #{tpu_custom_call.1} parent=0
    _
  %s9 = ssub.s32 1, %s7
  %s10 = scalar_select 0, %s9, %s7
  loop: start=0, step=1, limit=5
  $region2: #{tpu_custom_call.1} parent=0 // loop_pre_header
    _
  $region3: #{tpu_custom_call.1} parent=0 // loop_header
    %s12 = sphi 0, %s16
    %p13 = scmp.ge.s32.totalorder %s12, 5
    %s22 = sphi 0, %s24
    %s25 = sphi 0, %s22
    %s26 = sphi 0, %s25
    %s42 = sphi 0, %s26
    %s48 = sphi 0, %s50
    %s51 = sphi 0, %s48
    %s52 = sphi 0, %s51
    %s68 = sphi 0, %s52
    %s72 = sphi 0, %s72
    %s74 = sphi 0, %s72
    %s75 = sphi 0, %s74
    %s89 = sphi 0, %s75
    %s93 = sphi 0, %s93
    %s95 = sphi 0, %s93
    %s96 = sphi 0, %s95
    %s110 = sphi 0, %s96
    %s114 = sphi 0, %s114
    %s116 = sphi 0, %s114
    %s117 = sphi 0, %s116
    %s131 = sphi 0, %s117
    %s135 = sphi 0, %s135
    %s137 = sphi 0, %s135
    %s138 = sphi 0, %s137
    %s152 = sphi 0, %s138
    %s158 = sphi 0, %s160
    %s161 = sphi 0, %s158
    %s162 = sphi 0, %s161
    %s178 = sphi 0, %s162
  $region4: #{tpu_custom_call.1} parent=0 // loop_header_branch
    %15 = sbr.rel (%p13) target = $region8
  $region5: #{tpu_custom_call.1} parent=0 // loop_body
    %s17 = ssub.s32 %s12, 1
    %s18 = ssub.s32 %s12, 2
    %s19 = sadd.s32 %s12, 1
    %s20 = ssub.s32 %s12, %s19
    %p21 = scmp.eq.s32.totalorder %s20, 0
    %s23 = sadd.s32 %s22, 1
    %s24 = scalar_select %p21, %s22, %s23
    %p27 = pneg %p21
    %p28 = scmp.eq.s32.totalorder %s12, 2
    %p29 = por %p27, %p28
    %p30 = scmp.ne.s32.totalorder %s22, %s25
    %p31 = scmp.eq.s32.totalorder %s12, 0
    %p32 = por %p30, %p31
    %p33 = scmp.ne.s32.totalorder %s22, %s25
    %p34 = scmp.eq.s32.totalorder %s17, 2
    %p35 = por %p33, %p34
    %p36 = scmp.ne.s32.totalorder %s25, %s26
    %p37 = scmp.eq.s32.totalorder %s17, 0
    %p38 = por %p36, %p37
    %p39 = scmp.ne.s32.totalorder %s25, %s26
    %p40 = scmp.eq.s32.totalorder %s18, 2
    %p41 = por %p39, %p40
    %p43 = scmp.ne.s32.totalorder %s26, %s42
    %p44 = scmp.eq.s32.totalorder %s18, 0
    %p45 = por %p43, %p44
    %s46 = ssub.s32 %s12, %s19
    %p47 = scmp.eq.s32.totalorder %s46, 0
    %s49 = sadd.s32 %s48, 1
    %s50 = scalar_select %p47, %s48, %s49
    %p53 = pneg %p47
    %p54 = scmp.eq.s32.totalorder %s12, 2
    %p55 = por %p53, %p54
    %p56 = scmp.ne.s32.totalorder %s48, %s51
    %p57 = scmp.eq.s32.totalorder %s12, 0
    %p58 = por %p56, %p57
    %p59 = scmp.ne.s32.totalorder %s48, %s51
    %p60 = scmp.eq.s32.totalorder %s17, 2
    %p61 = por %p59, %p60
    %p62 = scmp.ne.s32.totalorder %s51, %s52
    %p63 = scmp.eq.s32.totalorder %s17, 0
    %p64 = por %p62, %p63
    %p65 = scmp.ne.s32.totalorder %s51, %s52
    %p66 = scmp.eq.s32.totalorder %s18, 2
    %p67 = por %p65, %p66
    %p69 = scmp.ne.s32.totalorder %s52, %s68
    %p70 = scmp.eq.s32.totalorder %s18, 0
    %p71 = por %p69, %p70
    %s73 = sadd.s32 %s72, 1
    %p76 = scmp.eq.s32.totalorder %s12, 2
    %p77 = scmp.ne.s32.totalorder %s72, %s74
    %p78 = scmp.eq.s32.totalorder %s12, 0
    %p79 = por %p77, %p78
    %p80 = scmp.ne.s32.totalorder %s72, %s74
    %p81 = scmp.eq.s32.totalorder %s17, 2
    %p82 = por %p80, %p81
    %p83 = scmp.ne.s32.totalorder %s74, %s75
    %p84 = scmp.eq.s32.totalorder %s17, 0
    %p85 = por %p83, %p84
    %p86 = scmp.ne.s32.totalorder %s74, %s75
    %p87 = scmp.eq.s32.totalorder %s18, 2
    %p88 = por %p86, %p87
    %p90 = scmp.ne.s32.totalorder %s75, %s89
    %p91 = scmp.eq.s32.totalorder %s18, 0
    %p92 = por %p90, %p91
    %s94 = sadd.s32 %s93, 1
    %p97 = scmp.eq.s32.totalorder %s12, 2
    %p98 = scmp.ne.s32.totalorder %s93, %s95
    %p99 = scmp.eq.s32.totalorder %s12, 0
    %p100 = por %p98, %p99
    %p101 = scmp.ne.s32.totalorder %s93, %s95
    %p102 = scmp.eq.s32.totalorder %s17, 2
    %p103 = por %p101, %p102
    %p104 = scmp.ne.s32.totalorder %s95, %s96
    %p105 = scmp.eq.s32.totalorder %s17, 0
    %p106 = por %p104, %p105
    %p107 = scmp.ne.s32.totalorder %s95, %s96
    %p108 = scmp.eq.s32.totalorder %s18, 2
    %p109 = por %p107, %p108
    %p111 = scmp.ne.s32.totalorder %s96, %s110
    %p112 = scmp.eq.s32.totalorder %s18, 0
    %p113 = por %p111, %p112
    %s115 = sadd.s32 %s114, 1
    %p118 = scmp.eq.s32.totalorder %s12, 2
    %p119 = scmp.ne.s32.totalorder %s114, %s116
    %p120 = scmp.eq.s32.totalorder %s12, 0
    %p121 = por %p119, %p120
    %p122 = scmp.ne.s32.totalorder %s114, %s116
    %p123 = scmp.eq.s32.totalorder %s17, 2
    %p124 = por %p122, %p123
    %p125 = scmp.ne.s32.totalorder %s116, %s117
    %p126 = scmp.eq.s32.totalorder %s17, 0
    %p127 = por %p125, %p126
    %p128 = scmp.ne.s32.totalorder %s116, %s117
    %p129 = scmp.eq.s32.totalorder %s18, 2
    %p130 = por %p128, %p129
    %p132 = scmp.ne.s32.totalorder %s117, %s131
    %p133 = scmp.eq.s32.totalorder %s18, 0
    %p134 = por %p132, %p133
    %s136 = sadd.s32 %s135, 1
    %p139 = scmp.eq.s32.totalorder %s12, 2
    %p140 = scmp.ne.s32.totalorder %s135, %s137
    %p141 = scmp.eq.s32.totalorder %s12, 0
    %p142 = por %p140, %p141
    %p143 = scmp.ne.s32.totalorder %s135, %s137
    %p144 = scmp.eq.s32.totalorder %s17, 2
    %p145 = por %p143, %p144
    %p146 = scmp.ne.s32.totalorder %s137, %s138
    %p147 = scmp.eq.s32.totalorder %s17, 0
    %p148 = por %p146, %p147
    %p149 = scmp.ne.s32.totalorder %s137, %s138
    %p150 = scmp.eq.s32.totalorder %s18, 2
    %p151 = por %p149, %p150
    %p153 = scmp.ne.s32.totalorder %s138, %s152
    %p154 = scmp.eq.s32.totalorder %s18, 0
    %p155 = por %p153, %p154
    %s156 = ssub.s32 %s12, %s19
    %p157 = scmp.eq.s32.totalorder %s156, 0
    %s159 = sadd.s32 %s158, 1
    %s160 = scalar_select %p157, %s158, %s159
    %p163 = pneg %p157
    %p164 = scmp.eq.s32.totalorder %s12, 2
    %p165 = por %p163, %p164
    %p166 = scmp.ne.s32.totalorder %s158, %s161
    %p167 = scmp.eq.s32.totalorder %s12, 0
    %p168 = por %p166, %p167
    %p169 = scmp.ne.s32.totalorder %s158, %s161
    %p170 = scmp.eq.s32.totalorder %s17, 2
    %p171 = por %p169, %p170
    %p172 = scmp.ne.s32.totalorder %s161, %s162
    %p173 = scmp.eq.s32.totalorder %s17, 0
    %p174 = por %p172, %p173
    %p175 = scmp.ne.s32.totalorder %s161, %s162
    %p176 = scmp.eq.s32.totalorder %s18, 2
    %p177 = por %p175, %p176
    %p179 = scmp.ne.s32.totalorder %s162, %s178
    %p180 = scmp.eq.s32.totalorder %s18, 0
    %p181 = por %p179, %p180
    %p182 = scmp.le.s32.totalorder 1, %s12
    %p183 = scmp.lt.s32.totalorder %s12, 4
    %p184 = pnand %p182, %p183
    %p185 = pneg %p184
    // Predicated region
    $region9: #{tpu_custom_call.1} parent=5 // pred_check
      _
    $region10: #{tpu_custom_call.1} parent=5 // pred_check_branch
      %187 = sbr.rel (%p184) target = $region12
    $region11: #{tpu_custom_call.1} parent=5 // pred_region
      %s188 = ssub.s32 %s12, 1
      // Predicated region
      $region13: #{tpu_custom_call.1} parent=11 // pred_check
        %p189 = pneg %p85
      $region14: #{tpu_custom_call.1} parent=11 // pred_check_branch
        %191 = sbr.rel (%p189) target = $region16
      $region15: #{tpu_custom_call.1} parent=11 // pred_region
        _
      $region16: #{tpu_custom_call.1} parent=11 // pred_fallthru
        _
      // Predicated region
      $region17: #{tpu_custom_call.1} parent=11 // pred_check
        %p192 = pneg %p106
      $region18: #{tpu_custom_call.1} parent=11 // pred_check_branch
        %194 = sbr.rel (%p192) target = $region20
      $region19: #{tpu_custom_call.1} parent=11 // pred_region
        _
      $region20: #{tpu_custom_call.1} parent=11 // pred_fallthru
        _
      // Predicated region
      $region21: #{tpu_custom_call.1} parent=11 // pred_check
        %p195 = pneg %p127
      $region22: #{tpu_custom_call.1} parent=11 // pred_check_branch
        %197 = sbr.rel (%p195) target = $region24
      $region23: #{tpu_custom_call.1} parent=11 // pred_region
        _
      $region24: #{tpu_custom_call.1} parent=11 // pred_fallthru
        _
      // Predicated region
      $region25: #{tpu_custom_call.1} parent=11 // pred_check
        %p198 = pneg %p148
      $region26: #{tpu_custom_call.1} parent=11 // pred_check_branch
        %200 = sbr.rel (%p198) target = $region28
      $region27: #{tpu_custom_call.1} parent=11 // pred_region
        _
      $region28: #{tpu_custom_call.1} parent=11 // pred_fallthru
        _
    $region12: #{tpu_custom_call.1} parent=5 // pred_fallthru
      _
    %p201 = scmp.lt.s32.totalorder %s12, 3
    // Predicated region
    $region29: #{tpu_custom_call.1} parent=5 // pred_check
      %p202 = pneg %p201
    $region30: #{tpu_custom_call.1} parent=5 // pred_check_branch
      %204 = sbr.rel (%p202) target = $region32
    $region31: #{tpu_custom_call.1} parent=5 // pred_region
      // Predicated region
      $region33: #{tpu_custom_call.1} parent=31 // pred_check
        %p205 = pneg %p32
      $region34: #{tpu_custom_call.1} parent=31 // pred_check_branch
        %207 = sbr.rel (%p205) target = $region36
      $region35: #{tpu_custom_call.1} parent=31 // pred_region
        %s208 = smul.u32 2, %s12
        %p209 = scmp.lt.s32.totalorder %s208, 5
        %s210 = scalar_select %p209, %s208, 5
        %s211 = smul.addr %s210, 8
        %s212 = scalar_lea.vmem %s0, %s211
        %s213 = smul.u32 2, %s12
      $region36: #{tpu_custom_call.1} parent=31 // pred_fallthru
        _
      // Predicated region
      $region37: #{tpu_custom_call.1} parent=31 // pred_check
        %p214 = pneg %p58
      $region38: #{tpu_custom_call.1} parent=31 // pred_check_branch
        %216 = sbr.rel (%p214) target = $region40
      $region39: #{tpu_custom_call.1} parent=31 // pred_region
        %s217 = smul.u32 2, %s12
        %p218 = scmp.lt.s32.totalorder %s217, 5
        %s219 = scalar_select %p218, %s217, 5
        %s220 = smul.addr %s219, 8
        %s221 = scalar_lea.vmem %s1, %s220
        %s222 = smul.u32 2, %s12
      $region40: #{tpu_custom_call.1} parent=31 // pred_fallthru
        _
    $region32: #{tpu_custom_call.1} parent=5 // pred_fallthru
      _
    %p223 = scmp.le.s32.totalorder 1, %s12
    %p224 = scmp.lt.s32.totalorder %s12, 4
    %p225 = pnand %p223, %p224
    %p226 = pneg %p225
    // Predicated region
    $region41: #{tpu_custom_call.1} parent=5 // pred_check
      _
    $region42: #{tpu_custom_call.1} parent=5 // pred_check_branch
      %228 = sbr.rel (%p225) target = $region44
    $region43: #{tpu_custom_call.1} parent=5 // pred_region
      %s229 = ssub.s32 %s12, 1
      %s230 = smul.u32 2, %s17
      %p231 = scmp.lt.s32.totalorder %s230, 5
      %s232 = scalar_select %p231, %s230, 5
      %s233 = smul.addr %s232, 8
      %s234 = scalar_lea.vmem %s0, %s233
      %p235 = pneg %p38
      %p236 = pneg %p35
      %s237 = smul.u32 2, %s17
      %p238 = scmp.lt.s32.totalorder %s237, 5
      %s239 = scalar_select %p238, %s237, 5
      %s240 = smul.addr %s239, 8
      %s241 = scalar_lea.vmem %s1, %s240
      %p242 = pneg %p64
      %p243 = pneg %p61
      %p244 = pneg %p85
      %p245 = pneg %p82
      %p246 = pneg %p106
      %p247 = pneg %p103
      %p248 = pneg %p127
      %p249 = pneg %p124
      %p250 = pneg %p148
      %p251 = pneg %p145
      %p252 = pneg %p174
      %p253 = pneg %p171
      %s254 = smul.u32 2, %s17
      %p255 = scmp.lt.s32.totalorder %s254, 5
      %s256 = scalar_select %p255, %s254, 5
      %s257 = smul.addr %s256, 8
      %s258 = scalar_lea.vmem %s6, %s257
      %s259 = smul.u32 2, %s17
      %p260 = scmp.lt.s32.totalorder %s259, 5
      %s261 = scalar_select %p260, %s259, 5
      %s262 = smul.addr %s261, 8
      %s263 = scalar_lea.vmem %s0, %s262
      %s264 = smul.u32 2, %s17
      %s265 = smul.u32 2, %s17
      %p266 = scmp.lt.s32.totalorder %s265, 5
      %s267 = scalar_select %p266, %s265, 5
      %s268 = smul.addr %s267, 8
      %s269 = scalar_lea.vmem %s1, %s268
      %s270 = smul.u32 2, %s17
      %s271 = smul.u32 2, %s17
      %p272 = scmp.lt.s32.totalorder %s271, 5
      %s273 = scalar_select %p272, %s271, 5
      %s274 = smul.addr %s273, 8
      %s275 = scalar_lea.vmem %s6, %s274
      %s276 = smul.u32 2, %s17
      %v277 = vld [vmem:[%s263] sm:$0xff]
      %v278 = vld [vmem:[%s263 + $0x8] sm:$0xff]
      %v279 = vld [vmem:[%s2] sm:$0xff]
      %v280 = vld [vmem:[%s2 + $0x8] sm:$0xff]
      %v281 = vld [vmem:[%s2 + $0x10] sm:$0xff]
      %v282 = vld [vmem:[%s2 + $0x18] sm:$0xff]
      %v283 = vld [vmem:[%s269] sm:$0xff]
      %v284 = vld [vmem:[%s269 + $0x8] sm:$0xff]
      %vm285 = vcmask 261120
      %v287 = vsel %vm285, %v283, 0
      %v290 = vsel %vm285, %v284, 0
      %292 = vmatprep.subr.mxu0 0.0
      %293 = vmatpush1.msra.mxu0 0.0
      %294 = vmatprep.subr.mxu0 0.0
      %295 = vmatpush1.msra.mxu0 0.0
      %296 = vmatprep.subr.mxu0 0.0
      %297 = vmatpush1.msra.mxu0 0.0
      %298 = vmatprep.subr.mxu0 0.0
      %299 = vmatpush1.msra.mxu0 0.0
      %300 = vmatprep.subr.mxu0 0.0
      %301 = vmatpush1.msra.mxu0 0.0
      %302 = vmatprep.subr.mxu0 0.0
      %303 = vmatpush1.msra.mxu0 0.0
      %304 = vmatprep.subr.mxu0 0.0
      %305 = vmatpush1.msra.mxu0 0.0
      %306 = vmatprep.subr.mxu0 0.0
      %307 = vmatpush1.msra.mxu0 0.0
      %308 = vmatprep.subr.mxu0 0.0
      %309 = vmatpush1.msra.mxu0 0.0
      %310 = vmatprep.subr.mxu0 0.0
      %311 = vmatpush1.msra.mxu0 0.0
      %312 = vmatprep.subr.mxu0 0.0
      %313 = vmatpush1.msra.mxu0 0.0
      %314 = vmatprep.subr.mxu0 0.0
      %315 = vmatpush1.msra.mxu0 0.0
      %316 = vmatprep.subr.mxu0 0.0
      %317 = vmatpush1.msra.mxu0 %v282
      %318 = vmatprep.subr.mxu0 0.0
      %319 = vmatpush1.msra.mxu0 %v281
      %320 = vmatprep.subr.mxu0 0.0
      %321 = vmatpush1.msra.mxu0 %v280
      %322 = vmatprep.subr.mxu0 0.0
      %323 = vmatpush1.msra.mxu0 %v279
      %324 = vmatprep.subr.mxu0 0.0
      %325 = vmatpush2.msra.mxu0 0.0
      %326 = vmatprep.subr.mxu0 0.0
      %327 = vmatpush2.msra.mxu0 0.0
      %328 = vmatprep.subr.mxu0 0.0
      %329 = vmatpush2.msra.mxu0 0.0
      %330 = vmatprep.subr.mxu0 0.0
      %331 = vmatpush2.msra.mxu0 0.0
      %332 = vmatprep.subr.mxu0 0.0
      %333 = vmatpush2.msra.mxu0 0.0
      %334 = vmatprep.subr.mxu0 0.0
      %335 = vmatpush2.msra.mxu0 0.0
      %336 = vmatprep.subr.mxu0 0.0
      %337 = vmatpush2.msra.mxu0 0.0
      %338 = vmatprep.subr.mxu0 0.0
      %339 = vmatpush2.msra.mxu0 0.0
      %340 = vmatprep.subr.mxu0 0.0
      %341 = vmatpush2.msra.mxu0 0.0
      %342 = vmatprep.subr.mxu0 0.0
      %343 = vmatpush2.msra.mxu0 0.0
      %344 = vmatprep.subr.mxu0 0.0
      %345 = vmatpush2.msra.mxu0 0.0
      %346 = vmatprep.subr.mxu0 0.0
      %347 = vmatpush2.msra.mxu0 0.0
      %348 = vmatprep.subr.mxu0 0.0
      %349 = vmatpush2.msra.mxu0 0.0
      %350 = vmatprep.subr.mxu0 0.0
      %351 = vmatpush2.msra.mxu0 0.0
      %352 = vmatprep.subr.mxu0 0.0
      %353 = vmatpush2.msra.mxu0 0.0
      %354 = vmatprep.subr.mxu0 0.0
      %355 = vmatpush2.msra.mxu0 0.0
      %356 = vmatprep.mubr.f32.mxu0 0.0
      %357 = vmatmul.mubr.f32.gmra.mxu0 %v287
      %v358 = vpop.f32.mrf.mxu0
      %v359 = vadd.f32 0.0, %v358
      %v360 = vpop.f32.mrf.mxu0
      %361 = vmatprep.mubr.f32.mxu0 0.0
      %362 = vmatmul.mubr.f32.gmra.mxu0 %v290
      %v363 = vpop.f32.mrf.mxu0
      %v364 = vadd.f32 0.0, %v363
      %v365 = vpop.f32.mrf.mxu0
      %366 = vdwg.mxu0
      %367 = vrot.lane.b32.xlu0 %v359, 64
      %v368 = vpop.permute.xlu0 %367
      %369 = vrot.lane.b32.xlu0 %v364, 64
      %v370 = vpop.permute.xlu0 %369
      %v372 = vsel %vm285, %v277, 0
      %v375 = vsel %vm285, %v278, 0
      %377 = vmatprep.subr.mxu0 0.0
      %378 = vmatpush1.msra.mxu0 0.0
      %379 = vmatprep.subr.mxu0 0.0
      %380 = vmatpush1.msra.mxu0 0.0
      %381 = vmatprep.subr.mxu0 0.0
      %382 = vmatpush1.msra.mxu0 0.0
      %383 = vmatprep.subr.mxu0 0.0
      %384 = vmatpush1.msra.mxu0 0.0
      %385 = vmatprep.subr.mxu0 0.0
      %386 = vmatpush1.msra.mxu0 0.0
      %387 = vmatprep.subr.mxu0 0.0
      %388 = vmatpush1.msra.mxu0 0.0
      %389 = vmatprep.subr.mxu0 0.0
      %390 = vmatpush1.msra.mxu0 0.0
      %391 = vmatprep.subr.mxu0 0.0
      %392 = vmatpush1.msra.mxu0 0.0
      %393 = vmatprep.subr.mxu0 0.0
      %394 = vmatpush1.msra.mxu0 0.0
      %395 = vmatprep.subr.mxu0 0.0
      %396 = vmatpush1.msra.mxu0 0.0
      %397 = vmatprep.subr.mxu0 0.0
      %398 = vmatpush1.msra.mxu0 0.0
      %399 = vmatprep.subr.mxu0 0.0
      %400 = vmatpush1.msra.mxu0 0.0
      %401 = vmatprep.subr.mxu0 0.0
      %402 = vmatpush1.msra.mxu0 %v282
      %403 = vmatprep.subr.mxu0 0.0
      %404 = vmatpush1.msra.mxu0 %v281
      %405 = vmatprep.subr.mxu0 0.0
      %406 = vmatpush1.msra.mxu0 %v280
      %407 = vmatprep.subr.mxu0 0.0
      %408 = vmatpush1.msra.mxu0 %v279
      %409 = vmatprep.subr.mxu0 0.0
      %410 = vmatpush2.msra.mxu0 0.0
      %411 = vmatprep.subr.mxu0 0.0
      %412 = vmatpush2.msra.mxu0 0.0
      %413 = vmatprep.subr.mxu0 0.0
      %414 = vmatpush2.msra.mxu0 0.0
      %415 = vmatprep.subr.mxu0 0.0
      %416 = vmatpush2.msra.mxu0 0.0
      %417 = vmatprep.subr.mxu0 0.0
      %418 = vmatpush2.msra.mxu0 0.0
      %419 = vmatprep.subr.mxu0 0.0
      %420 = vmatpush2.msra.mxu0 0.0
      %421 = vmatprep.subr.mxu0 0.0
      %422 = vmatpush2.msra.mxu0 0.0
      %423 = vmatprep.subr.mxu0 0.0
      %424 = vmatpush2.msra.mxu0 0.0
      %425 = vmatprep.subr.mxu0 0.0
      %426 = vmatpush2.msra.mxu0 0.0
      %427 = vmatprep.subr.mxu0 0.0
      %428 = vmatpush2.msra.mxu0 0.0
      %429 = vmatprep.subr.mxu0 0.0
      %430 = vmatpush2.msra.mxu0 0.0
      %431 = vmatprep.subr.mxu0 0.0
      %432 = vmatpush2.msra.mxu0 0.0
      %433 = vmatprep.subr.mxu0 0.0
      %434 = vmatpush2.msra.mxu0 0.0
      %435 = vmatprep.subr.mxu0 0.0
      %436 = vmatpush2.msra.mxu0 0.0
      %437 = vmatprep.subr.mxu0 0.0
      %438 = vmatpush2.msra.mxu0 0.0
      %439 = vmatprep.subr.mxu0 0.0
      %440 = vmatpush2.msra.mxu0 0.0
      %441 = vmatprep.mubr.f32.mxu0 0.0
      %442 = vmatmul.mubr.f32.gmra.mxu0 %v372
      %v443 = vpop.f32.mrf.mxu0
      %v444 = vadd.f32 %v368, %v443
      %v445 = vpop.f32.mrf.mxu0
      %446 = vmatprep.mubr.f32.mxu0 0.0
      %447 = vmatmul.mubr.f32.gmra.mxu0 %v375
      %v448 = vpop.f32.mrf.mxu0
      %v449 = vadd.f32 %v370, %v448
      %v450 = vpop.f32.mrf.mxu0
      %451 = vdwg.mxu0
      %v452 = vld [vmem:[%s3] sm:$0x1]
      %v454 = vlaneseq
      %v455 = vshrl.u32 %v454, 7
      %v456 = vsub.s32 0, %v455
      %v457 = vrot.slane %v452, %v456
      %v459 = vadd.f32 %v444, %v457
      %v460 = vadd.f32 %v449, %v457
      %v461 = vmax.f32 %v459, 0.0
      %v462 = vmax.f32 %v460, 0.0
      %v463 = vld [vmem:[%s4] sm:$0xff]
      %v464 = vld [vmem:[%s4 + $0x8] sm:$0xff]
      %v465 = vld [vmem:[%s4 + $0x10] sm:$0xff]
      %v466 = vld [vmem:[%s4 + $0x18] sm:$0xff]
      %v467 = vld [vmem:[%s4 + $0x20] sm:$0xff]
      %v468 = vld [vmem:[%s4 + $0x28] sm:$0xff]
      %v469 = vld [vmem:[%s4 + $0x30] sm:$0xff]
      %v470 = vld [vmem:[%s4 + $0x38] sm:$0xff]
      %v471 = vld [vmem:[%s4 + $0x40] sm:$0xff]
      %v472 = vld [vmem:[%s4 + $0x48] sm:$0xff]
      %v473 = vld [vmem:[%s4 + $0x50] sm:$0xff]
      %v474 = vld [vmem:[%s4 + $0x58] sm:$0xff]
      %v475 = vld [vmem:[%s4 + $0x60] sm:$0xff]
      %v476 = vld [vmem:[%s4 + $0x68] sm:$0xff]
      %v477 = vld [vmem:[%s4 + $0x70] sm:$0xff]
      %v478 = vld [vmem:[%s4 + $0x78] sm:$0xff]
      %v479 = vld [vmem:[%s5] sm:$0x1]
      %v480 = vmul.f32 %v479, 2.0
      %v482 = vlaneseq
      %v483 = vshrl.u32 %v482, 7
      %v484 = vsub.s32 0, %v483
      %v485 = vrot.slane %v480, %v484
      %487 = vmatprep.subr.mxu0 0.0
      %488 = vmatpush1.msra.mxu0 %v478
      %489 = vmatprep.subr.mxu0 0.0
      %490 = vmatpush1.msra.mxu0 %v477
      %491 = vmatprep.subr.mxu0 0.0
      %492 = vmatpush1.msra.mxu0 %v476
      %493 = vmatprep.subr.mxu0 0.0
      %494 = vmatpush1.msra.mxu0 %v475
      %495 = vmatprep.subr.mxu0 0.0
      %496 = vmatpush1.msra.mxu0 %v474
      %497 = vmatprep.subr.mxu0 0.0
      %498 = vmatpush1.msra.mxu0 %v473
      %499 = vmatprep.subr.mxu0 0.0
      %500 = vmatpush1.msra.mxu0 %v472
      %501 = vmatprep.subr.mxu0 0.0
      %502 = vmatpush1.msra.mxu0 %v471
      %503 = vmatprep.subr.mxu0 0.0
      %504 = vmatpush1.msra.mxu0 %v470
      %505 = vmatprep.subr.mxu0 0.0
      %506 = vmatpush1.msra.mxu0 %v469
      %507 = vmatprep.subr.mxu0 0.0
      %508 = vmatpush1.msra.mxu0 %v468
      %509 = vmatprep.subr.mxu0 0.0
      %510 = vmatpush1.msra.mxu0 %v467
      %511 = vmatprep.subr.mxu0 0.0
      %512 = vmatpush1.msra.mxu0 %v466
      %513 = vmatprep.subr.mxu0 0.0
      %514 = vmatpush1.msra.mxu0 %v465
      %515 = vmatprep.subr.mxu0 0.0
      %516 = vmatpush1.msra.mxu0 %v464
      %517 = vmatprep.subr.mxu0 0.0
      %518 = vmatpush1.msra.mxu0 %v463
      %519 = vmatprep.subr.mxu0 0.0
      %520 = vmatpush2.msra.mxu0 0.0
      %521 = vmatprep.subr.mxu0 0.0
      %522 = vmatpush2.msra.mxu0 0.0
      %523 = vmatprep.subr.mxu0 0.0
      %524 = vmatpush2.msra.mxu0 0.0
      %525 = vmatprep.subr.mxu0 0.0
      %526 = vmatpush2.msra.mxu0 0.0
      %527 = vmatprep.subr.mxu0 0.0
      %528 = vmatpush2.msra.mxu0 0.0
      %529 = vmatprep.subr.mxu0 0.0
      %530 = vmatpush2.msra.mxu0 0.0
      %531 = vmatprep.subr.mxu0 0.0
      %532 = vmatpush2.msra.mxu0 0.0
      %533 = vmatprep.subr.mxu0 0.0
      %534 = vmatpush2.msra.mxu0 0.0
      %535 = vmatprep.subr.mxu0 0.0
      %536 = vmatpush2.msra.mxu0 0.0
      %537 = vmatprep.subr.mxu0 0.0
      %538 = vmatpush2.msra.mxu0 0.0
      %539 = vmatprep.subr.mxu0 0.0
      %540 = vmatpush2.msra.mxu0 0.0
      %541 = vmatprep.subr.mxu0 0.0
      %542 = vmatpush2.msra.mxu0 0.0
      %543 = vmatprep.subr.mxu0 0.0
      %544 = vmatpush2.msra.mxu0 0.0
      %545 = vmatprep.subr.mxu0 0.0
      %546 = vmatpush2.msra.mxu0 0.0
      %547 = vmatprep.subr.mxu0 0.0
      %548 = vmatpush2.msra.mxu0 0.0
      %549 = vmatprep.subr.mxu0 0.0
      %550 = vmatpush2.msra.mxu0 0.0
      %551 = vmatprep.mubr.f32.mxu0 0.0
      %552 = vmatmul.mubr.f32.gmra.mxu0 %v461
      %v553 = vpop.f32.mrf.mxu0
      %v554 = vadd.f32 %v485, %v553
      %v555 = vpop.f32.mrf.mxu0
      %556 = vmatprep.mubr.f32.mxu0 0.0
      %557 = vmatmul.mubr.f32.gmra.mxu0 %v462
      %v558 = vpop.f32.mrf.mxu0
      %v559 = vadd.f32 %v485, %v558
      %v560 = vpop.f32.mrf.mxu0
      %561 = vdwg.mxu0
      %vm562 = vcmask 64512
      %563 = vst.msk [vmem:[%s275] sm:$0xff] %vm562, %v554
      %564 = vst.msk [vmem:[%s275 + $0x8] sm:$0xff] %vm562, %v559
      %s565 = smul.u32 2, %s17
      %p566 = scmp.lt.s32.totalorder %s565, 5
      %s567 = scalar_select %p566, %s565, 5
      %s568 = smul.addr %s567, 8
      %s569 = scalar_lea.vmem %s6, %s568
      // Predicated region
      $region45: #{tpu_custom_call.1} parent=43 // pred_check
        %p570 = pneg %p171
      $region46: #{tpu_custom_call.1} parent=43 // pred_check_branch
        %572 = sbr.rel (%p570) target = $region48
      $region47: #{tpu_custom_call.1} parent=43 // pred_region
        %s573 = smul.u32 2, %s17
      $region48: #{tpu_custom_call.1} parent=43 // pred_fallthru
        _
    $region44: #{tpu_custom_call.1} parent=5 // pred_fallthru
      _
    %p574 = scmp.le.s32.totalorder 2, %s12
    // Predicated region
    $region49: #{tpu_custom_call.1} parent=5 // pred_check
      %p575 = pneg %p574
    $region50: #{tpu_custom_call.1} parent=5 // pred_check_branch
      %577 = sbr.rel (%p575) target = $region52
    $region51: #{tpu_custom_call.1} parent=5 // pred_region
      %s578 = ssub.s32 %s12, 2
      // Predicated region
      $region53: #{tpu_custom_call.1} parent=51 // pred_check
        %p579 = pneg %p177
      $region54: #{tpu_custom_call.1} parent=51 // pred_check_branch
        %581 = sbr.rel (%p579) target = $region56
      $region55: #{tpu_custom_call.1} parent=51 // pred_region
        %s582 = smul.u32 2, %s18
        %p583 = scmp.lt.s32.totalorder %s582, 5
        %s584 = scalar_select %p583, %s582, 5
        %s585 = smul.addr %s584, 8
        %s586 = scalar_lea.vmem %s6, %s585
      $region56: #{tpu_custom_call.1} parent=51 // pred_fallthru
        _
    $region52: #{tpu_custom_call.1} parent=5 // pred_fallthru
      _
  $region6: #{tpu_custom_call.1} parent=0 // loop_footer
    %s16 = sadd.s32 1, %s12
  $region7: #{tpu_custom_call.1} parent=0 // loop_footer_branch
    %11 = sbr.rel target = $region3
  $region8: #{tpu_custom_call.1} parent=0 // loop_exit
    _

</llo_original>
